<compile_context>
chip_gen: v6e
topology: v6e:2x2x1
jax: 0.10.0
libtpu: 0.0.40
codegen_flags: <defaults>
</compile_context>

<pallas_src>
import functools

import jax
import jax.numpy as jnp
from jax.experimental import pallas as pl
from jax.experimental.pallas import tpu as pltpu

LN_EPS = 1e-5                      # nn.LayerNorm default
INV_SQRT2 = 0.7071067811865476     # 1/sqrt(2) for the exact-erf GELU


# --------------------------------------------------------------------------- #
# Kernel bodies
# --------------------------------------------------------------------------- #
def _layernorm_f32(x, gamma, beta):
    mean = jnp.mean(x, axis=-1, keepdims=True)
    var = jnp.mean((x - mean) ** 2, axis=-1, keepdims=True)   # biased, like PT
    return (x - mean) * jax.lax.rsqrt(var + LN_EPS) * gamma + beta


def _gelu_exact_f32(h):
    return 0.5 * h * (1.0 + jax.lax.erf(h * jnp.float32(INV_SQRT2)))


def _ffn_kernel_resident(x_ref, gamma_ref, beta_ref, w1_ref, b1_ref, w2_ref,
                         b2_ref, o_ref, *, matmul_dtype):
    """Whole W1/W2 resident in VMEM; one row tile per grid step."""
    x = x_ref[...].astype(jnp.float32)                               # (TM, D)
    xn = _layernorm_f32(x, gamma_ref[...].astype(jnp.float32),
                        beta_ref[...].astype(jnp.float32))
    h = jnp.dot(xn.astype(matmul_dtype), w1_ref[...],
                preferred_element_type=jnp.float32)                  # (TM, H)
    h = _gelu_exact_f32(h + b1_ref[...].astype(jnp.float32))
    y = jnp.dot(h.astype(matmul_dtype), w2_ref[...],
                preferred_element_type=jnp.float32)                  # (TM, D)
    o_ref[...] = (y + b2_ref[...].astype(jnp.float32)).astype(o_ref.dtype)


def _ffn_kernel_htiled(x_ref, gamma_ref, beta_ref, w1_ref, b1_ref, w2_ref,
                       b2_ref, o_ref, xn_ref, acc_ref, *, matmul_dtype):
    """H-tiled weights; grid = (row tiles, hidden tiles), hidden is reduction."""
    j = pl.program_id(1)

    @pl.when(j == 0)
    def _():
        x = x_ref[...].astype(jnp.float32)
        xn = _layernorm_f32(x, gamma_ref[...].astype(jnp.float32),
                            beta_ref[...].astype(jnp.float32))
        xn_ref[...] = xn.astype(matmul_dtype)
        acc_ref[...] = jnp.zeros_like(acc_ref)

    h = jnp.dot(xn_ref[...], w1_ref[...],
                preferred_element_type=jnp.float32)                  # (TM, TH)
    h = _gelu_exact_f32(h + b1_ref[...].astype(jnp.float32))
    acc_ref[...] += jnp.dot(h.astype(matmul_dtype), w2_ref[...],
                            preferred_element_type=jnp.float32)      # (TM, D)

    @pl.when(j == pl.num_programs(1) - 1)
    def _():
        o_ref[...] = (acc_ref[...]
                      + b2_ref[...].astype(jnp.float32)).astype(o_ref.dtype)


# --------------------------------------------------------------------------- #
# Wrapper
# --------------------------------------------------------------------------- #
def _round_up(x, m):
    return ((x + m - 1) // m) * m


def _vmem_capacity_bytes():
    try:
        return int(pltpu.get_tpu_info().vmem_capacity_bytes)
    except Exception:
        return 64 * 1024 * 1024    # conservative fallback (v7x per-TC VMEM)


def feedforward_pallas(x, gamma, beta, w1, b1, w2, b2, *,
                       tile_m=None, tile_h=None,
                       matmul_dtype=jnp.bfloat16):
    """x: (B, N, D). Returns (B, N, D) in x.dtype."""
    B, N, D = x.shape
    Din, H = w1.shape
    assert Din == D and w2.shape == (H, D)
    M = B * N

    wbytes = jnp.dtype(matmul_dtype).itemsize
    xbytes = jnp.dtype(x.dtype).itemsize
    vmem_cap = _vmem_capacity_bytes()

    # ---- row tile: clamp to the problem, sublane-aligned ----
    sublane = 8 if wbytes == 4 else 16
    default_tm = 512 if vmem_cap >= (96 << 20) else 256
    tm = default_tm if tile_m is None else tile_m
    tm = min(_round_up(tm, sublane), _round_up(M, sublane))
    grid_m = (M + tm - 1) // tm

    x2d = x.reshape(M, D)
    gamma2 = gamma.reshape(1, D).astype(jnp.float32)
    beta2 = beta.reshape(1, D).astype(jnp.float32)
    b1_2 = b1.reshape(1, H).astype(jnp.float32)
    b2_2 = b2.reshape(1, D).astype(jnp.float32)
    w1c = w1.astype(matmul_dtype)     # cast once here: halves weight HBM bytes
    w2c = w2.astype(matmul_dtype)

    weight_bytes = 2 * D * H * wbytes

    # ---- pick the weight layout: resident vs. H-tiled ----
    th = tile_h
    if th is None and weight_bytes > 0.4 * vmem_cap and H % 128 == 0:
        budget = int(0.3 * vmem_cap)       # double-buffered W1+W2 tiles
        cand, t = None, 128
        while t <= H:
            if H % t == 0 and 4 * D * t * wbytes <= budget:
                cand = t
            t += 128
        th = cand
    if th is not None:
        th = min(_round_up(th, 128), H)
        if H % th != 0:
            th = None     # ragged hidden tail would leak garbage into the acc

    vmem_full = pl.BlockSpec(memory_space=pltpu.MemorySpace.VMEM)
    params_bytes = (2 * D + H) * 4

    if th is None:
        # ---------------- resident-weight path ----------------
        est = (weight_bytes + params_bytes
               + 2 * tm * D * xbytes        # x tiles, double-buffered
               + 2 * tm * D * xbytes        # out tiles, double-buffered
               + 2 * tm * H * 4)            # hidden intermediate + headroom
        vmem_limit = int(min(max(2 * est, 32 << 20), int(0.85 * vmem_cap)))

        kernel = functools.partial(_ffn_kernel_resident,
                                   matmul_dtype=matmul_dtype)
        out = pl.pallas_call(
            kernel,
            out_shape=jax.ShapeDtypeStruct((M, D), x.dtype),
            grid_spec=pltpu.PrefetchScalarGridSpec(
                num_scalar_prefetch=0,
                grid=(grid_m,),
                in_specs=[
                    pl.BlockSpec((tm, D), lambda i: (i, 0)),   # x row tile
                    vmem_full,                                 # LN gamma
                    vmem_full,                                 # LN beta
                    vmem_full,                                 # W1 (D, H)
                    vmem_full,                                 # b1
                    vmem_full,                                 # W2 (H, D)
                    vmem_full,                                 # b2
                ],
                out_specs=pl.BlockSpec((tm, D), lambda i: (i, 0)),
            ),
            compiler_params=pltpu.CompilerParams(
                dimension_semantics=("parallel",),
                vmem_limit_bytes=vmem_limit),
            cost_estimate=pl.CostEstimate(
                flops=4 * M * D * H,
                transcendentals=M * H,
                bytes_accessed=weight_bytes + 2 * M * D * xbytes),
        )(x2d, gamma2, beta2, w1c, b1_2, w2c, b2_2)
    else:
        # ---------------- H-tiled weight path ----------------
        grid_h = H // th
        est = (2 * 2 * D * th * wbytes + 2 * th * 4 + params_bytes
               + 2 * tm * D * xbytes + 2 * tm * D * xbytes
               + tm * D * (wbytes + 4)      # xn + acc scratch
               + 2 * tm * th * 4)           # hidden tile + headroom
        vmem_limit = int(min(max(2 * est, 32 << 20), int(0.85 * vmem_cap)))

        kernel = functools.partial(_ffn_kernel_htiled,
                                   matmul_dtype=matmul_dtype)
        out = pl.pallas_call(
            kernel,
            out_shape=jax.ShapeDtypeStruct((M, D), x.dtype),
            grid_spec=pltpu.PrefetchScalarGridSpec(
                num_scalar_prefetch=0,
                grid=(grid_m, grid_h),
                in_specs=[
                    pl.BlockSpec((tm, D), lambda i, j: (i, 0)),   # x row tile
                    vmem_full,                                    # LN gamma
                    vmem_full,                                    # LN beta
                    pl.BlockSpec((D, th), lambda i, j: (0, j)),   # W1 col tile
                    pl.BlockSpec((1, th), lambda i, j: (0, j)),   # b1 tile
                    pl.BlockSpec((th, D), lambda i, j: (j, 0)),   # W2 row tile
                    vmem_full,                                    # b2
                ],
                out_specs=pl.BlockSpec((tm, D), lambda i, j: (i, 0)),
                scratch_shapes=[
                    pltpu.VMEM((tm, D), matmul_dtype),   # LN output (reused)
                    pltpu.VMEM((tm, D), jnp.float32),    # f32 accumulator
                ],
            ),
            compiler_params=pltpu.CompilerParams(
                dimension_semantics=("parallel", "arbitrary"),
                vmem_limit_bytes=vmem_limit),
            cost_estimate=pl.CostEstimate(
                flops=4 * M * D * H,
                transcendentals=M * H,
                bytes_accessed=grid_m * weight_bytes + 2 * M * D * xbytes),
        )(x2d, gamma2, beta2, w1c, b1_2, w2c, b2_2)

    return out.reshape(B, N, D)


# --------------------------------------------------------------------------- #
# Pure-JAX reference (mirrors the PyTorch module)
# --------------------------------------------------------------------------- #
def reference_ffn(x, gamma, beta, w1, b1, w2, b2):
    mean = jnp.mean(x, axis=-1, keepdims=True)
    var = jnp.mean((x - mean) ** 2, axis=-1, keepdims=True)
    xn = (x - mean) / jnp.sqrt(var + LN_EPS) * gamma + beta
    h = xn @ w1 + b1
    h = jax.nn.gelu(h, approximate=False)
    return h @ w2 + b2


if __name__ == "__main__":
    # Small but lane-dense shapes (D, H multiples of 128).
    B, N, D, H = 2, 8, 128, 256

    key = jax.random.PRNGKey(0)
    kx, kw1, kb1, kw2, kb2 = jax.random.split(key, 5)

    x = jax.random.normal(kx, (B, N, D), dtype=jnp.float32)

    # Deterministic synthetic parameters (not a checkpoint load).
    gamma = jnp.ones((D,), jnp.float32)
    beta = jnp.zeros((D,), jnp.float32)
    w1 = jax.random.normal(kw1, (D, H), jnp.float32) * (1.0 / jnp.sqrt(D))
    b1 = jax.random.normal(kb1, (H,), jnp.float32) * 0.01
    w2 = jax.random.normal(kw2, (H, D), jnp.float32) * (1.0 / jnp.sqrt(H))
    b2 = jax.random.normal(kb2, (D,), jnp.float32) * 0.01

    y_ref = reference_ffn(x, gamma, beta, w1, b1, w2, b2)

    # 1) resident-weight path, f32 matmuls (tight tolerance).
    y = jax.block_until_ready(
        feedforward_pallas(x, gamma, beta, w1, b1, w2, b2,
                           matmul_dtype=jnp.float32))
    assert y.shape == (B, N, D)
    assert jnp.allclose(y, y_ref, atol=1e-3, rtol=1e-3)

    # 2) resident-weight path, bf16 matmuls (default perf path).
    y = jax.block_until_ready(feedforward_pallas(x, gamma, beta, w1, b1, w2, b2))
    assert jnp.allclose(y, y_ref, atol=3e-2, rtol=3e-2)

    # 3) H-tiled weight path (forced via tile_h): the large-D*H layout,
    #    grid=(rows, hidden tiles) with f32 accumulator in scratch.
    y = jax.block_until_ready(
        feedforward_pallas(x, gamma, beta, w1, b1, w2, b2,
                           matmul_dtype=jnp.float32, tile_h=128))
    assert jnp.allclose(y, y_ref, atol=1e-3, rtol=1e-3)

    y = jax.block_until_ready(
        feedforward_pallas(x, gamma, beta, w1, b1, w2, b2, tile_h=128))
    assert jnp.allclose(y, y_ref, atol=3e-2, rtol=3e-2)

    # 4) ragged row count (M = 2*7 = 14, not a tile multiple): exercises the
    #    cdiv grid and masked tail stores — no wrapper pad or output slice.
    xr = jax.random.normal(kx, (2, 7, D), dtype=jnp.float32)
    yr_ref = reference_ffn(xr, gamma, beta, w1, b1, w2, b2)
    yr = jax.block_until_ready(
        feedforward_pallas(xr, gamma, beta, w1, b1, w2, b2,
                           matmul_dtype=jnp.float32, tile_m=8))
    assert yr.shape == (2, 7, D)
    assert jnp.allclose(yr, yr_ref, atol=1e-3, rtol=1e-3)

    print("KERNEL_OK")
</pallas_src>

<mosaic_0001>
module attributes {stable_mosaic.version = 11 : i64} {
  func.func @_ffn_kernel_resident(%arg0: i32, %arg1: memref<16x128xf32, #tpu.memory_space<vmem>>, %arg2: memref<1x128xf32, #tpu.memory_space<vmem>>, %arg3: memref<1x128xf32, #tpu.memory_space<vmem>>, %arg4: memref<128x256xf32, #tpu.memory_space<vmem>>, %arg5: memref<1x256xf32, #tpu.memory_space<vmem>>, %arg6: memref<256x128xf32, #tpu.memory_space<vmem>>, %arg7: memref<1x128xf32, #tpu.memory_space<vmem>>, %arg8: memref<16x128xf32, #tpu.memory_space<vmem>>) attributes {dimension_semantics = [#tpu.dimension_semantics<parallel>], iteration_bounds = array<i64: 1>, scalar_prefetch = 0 : i64, scratch_operands = 0 : i64, tpu.core_type = #tpu.core_type<tc>, window_params = [{transform_indices = @transform_0, window_bounds = array<i64: 16, 128>}, {pipeline_mode = #tpu.pipeline_mode<synchronous>, transform_indices = @transform_1, window_bounds = array<i64: 1, 128>}, {pipeline_mode = #tpu.pipeline_mode<synchronous>, transform_indices = @transform_2, window_bounds = array<i64: 1, 128>}, {pipeline_mode = #tpu.pipeline_mode<synchronous>, transform_indices = @transform_3, window_bounds = array<i64: 128, 256>}, {pipeline_mode = #tpu.pipeline_mode<synchronous>, transform_indices = @transform_4, window_bounds = array<i64: 1, 256>}, {pipeline_mode = #tpu.pipeline_mode<synchronous>, transform_indices = @transform_5, window_bounds = array<i64: 256, 128>}, {pipeline_mode = #tpu.pipeline_mode<synchronous>, transform_indices = @transform_6, window_bounds = array<i64: 1, 128>}, {transform_indices = @transform_7, window_bounds = array<i64: 16, 128>}]} {
    %c0 = arith.constant 0 : index
    %c0_0 = arith.constant 0 : index
    %0 = vector.load %arg1[%c0, %c0_0] : memref<16x128xf32, #tpu.memory_space<vmem>>, vector<16x128xf32>
    %c0_1 = arith.constant 0 : index
    %c0_2 = arith.constant 0 : index
    %1 = vector.load %arg2[%c0_1, %c0_2] : memref<1x128xf32, #tpu.memory_space<vmem>>, vector<1x128xf32>
    %c0_3 = arith.constant 0 : index
    %c0_4 = arith.constant 0 : index
    %2 = vector.load %arg3[%c0_3, %c0_4] : memref<1x128xf32, #tpu.memory_space<vmem>>, vector<1x128xf32>
    %cst = arith.constant dense<0.000000e+00> : vector<16xf32>
    %3 = vector.multi_reduction <add>, %0, %cst [1] : vector<16x128xf32> to vector<16xf32>
    %4 = vector.shape_cast %3 : vector<16xf32> to vector<16x1xf32>
    %cst_5 = arith.constant 1.280000e+02 : f32
    %5 = vector.broadcast %cst_5 : f32 to vector<16x1xf32>
    %6 = arith.divf %4, %5 : vector<16x1xf32>
    %7 = vector.broadcast %6 : vector<16x1xf32> to vector<16x128xf32>
    %8 = arith.subf %0, %7 : vector<16x128xf32>
    %9 = arith.mulf %8, %8 : vector<16x128xf32>
    %cst_6 = arith.constant dense<0.000000e+00> : vector<16xf32>
    %10 = vector.multi_reduction <add>, %9, %cst_6 [1] : vector<16x128xf32> to vector<16xf32>
    %11 = vector.shape_cast %10 : vector<16xf32> to vector<16x1xf32>
    %cst_7 = arith.constant 1.280000e+02 : f32
    %12 = vector.broadcast %cst_7 : f32 to vector<16x1xf32>
    %13 = arith.divf %11, %12 : vector<16x1xf32>
    %14 = vector.broadcast %6 : vector<16x1xf32> to vector<16x128xf32>
    %15 = arith.subf %0, %14 : vector<16x128xf32>
    %cst_8 = arith.constant 9.99999974E-6 : f32
    %16 = vector.broadcast %cst_8 : f32 to vector<16x1xf32>
    %17 = arith.addf %13, %16 : vector<16x1xf32>
    %18 = math.rsqrt %17 : vector<16x1xf32>
    %19 = vector.broadcast %18 : vector<16x1xf32> to vector<16x128xf32>
    %20 = arith.mulf %15, %19 : vector<16x128xf32>
    %21 = vector.broadcast %1 : vector<1x128xf32> to vector<16x128xf32>
    %22 = arith.mulf %20, %21 : vector<16x128xf32>
    %23 = vector.broadcast %2 : vector<1x128xf32> to vector<16x128xf32>
    %24 = arith.addf %22, %23 : vector<16x128xf32>
    %c0_9 = arith.constant 0 : index
    %c0_10 = arith.constant 0 : index
    %25 = vector.load %arg4[%c0_9, %c0_10] : memref<128x256xf32, #tpu.memory_space<vmem>>, vector<128x256xf32>
    %cst_11 = arith.constant dense<0.000000e+00> : vector<16x256xf32>
    %26 = tpu.matmul %24, %25, %cst_11 {dimension_numbers = #tpu.dot_dimension_numbers<[1], [0], [0], [1], [0, 0, 1, 1], [], []>} : vector<16x128xf32>, vector<128x256xf32>, vector<16x256xf32> -> vector<16x256xf32>
    %c0_12 = arith.constant 0 : index
    %c0_13 = arith.constant 0 : index
    %27 = vector.load %arg5[%c0_12, %c0_13] : memref<1x256xf32, #tpu.memory_space<vmem>>, vector<1x256xf32>
    %28 = vector.broadcast %27 : vector<1x256xf32> to vector<16x256xf32>
    %29 = arith.addf %26, %28 : vector<16x256xf32>
    %cst_14 = arith.constant 5.000000e-01 : f32
    %30 = vector.broadcast %cst_14 : f32 to vector<16x256xf32>
    %31 = arith.mulf %30, %29 : vector<16x256xf32>
    %cst_15 = arith.constant 0.707106769 : f32
    %32 = vector.broadcast %cst_15 : f32 to vector<16x256xf32>
    %33 = arith.mulf %29, %32 : vector<16x256xf32>
    %34 = math.erf %33 : vector<16x256xf32>
    %cst_16 = arith.constant 1.000000e+00 : f32
    %35 = vector.broadcast %cst_16 : f32 to vector<16x256xf32>
    %36 = arith.addf %35, %34 : vector<16x256xf32>
    %37 = arith.mulf %31, %36 : vector<16x256xf32>
    %c0_17 = arith.constant 0 : index
    %c0_18 = arith.constant 0 : index
    %38 = vector.load %arg6[%c0_17, %c0_18] : memref<256x128xf32, #tpu.memory_space<vmem>>, vector<256x128xf32>
    %cst_19 = arith.constant dense<0.000000e+00> : vector<16x128xf32>
    %39 = tpu.matmul %37, %38, %cst_19 {dimension_numbers = #tpu.dot_dimension_numbers<[1], [0], [0], [1], [0, 0, 1, 1], [], []>} : vector<16x256xf32>, vector<256x128xf32>, vector<16x128xf32> -> vector<16x128xf32>
    %c0_20 = arith.constant 0 : index
    %c0_21 = arith.constant 0 : index
    %40 = vector.load %arg7[%c0_20, %c0_21] : memref<1x128xf32, #tpu.memory_space<vmem>>, vector<1x128xf32>
    %41 = vector.broadcast %40 : vector<1x128xf32> to vector<16x128xf32>
    %42 = arith.addf %39, %41 : vector<16x128xf32>
    %c0_22 = arith.constant 0 : index
    %c0_23 = arith.constant 0 : index
    %43 = vector.load %arg8[%c0_22, %c0_23] : memref<16x128xf32, #tpu.memory_space<vmem>>, vector<16x128xf32>
    tpu.vector_store %arg8[%c0_22, %c0_23], %42 {strides = array<i32>} : memref<16x128xf32, #tpu.memory_space<vmem>>, vector<16x128xf32>,
    return
  }
  func.func @transform_0(%arg0: i32) -> (i32, i32) {
    %c0_i32 = arith.constant 0 : i32
    %c0_i32_0 = arith.constant 0 : i32
    return %arg0, %c0_i32 : i32, i32
  }
  func.func @transform_1(%arg0: i32) -> (i32, i32) {
    %c0_i32 = arith.constant 0 : i32
    %c0_i32_0 = arith.constant 0 : i32
    %c0_i32_1 = arith.constant 0 : i32
    return %c0_i32, %c0_i32_0 : i32, i32
  }
  func.func @transform_2(%arg0: i32) -> (i32, i32) {
    %c0_i32 = arith.constant 0 : i32
    %c0_i32_0 = arith.constant 0 : i32
    %c0_i32_1 = arith.constant 0 : i32
    return %c0_i32, %c0_i32_0 : i32, i32
  }
  func.func @transform_3(%arg0: i32) -> (i32, i32) {
    %c0_i32 = arith.constant 0 : i32
    %c0_i32_0 = arith.constant 0 : i32
    %c0_i32_1 = arith.constant 0 : i32
    return %c0_i32, %c0_i32_0 : i32, i32
  }
  func.func @transform_4(%arg0: i32) -> (i32, i32) {
    %c0_i32 = arith.constant 0 : i32
    %c0_i32_0 = arith.constant 0 : i32
    %c0_i32_1 = arith.constant 0 : i32
    return %c0_i32, %c0_i32_0 : i32, i32
  }
  func.func @transform_5(%arg0: i32) -> (i32, i32) {
    %c0_i32 = arith.constant 0 : i32
    %c0_i32_0 = arith.constant 0 : i32
    %c0_i32_1 = arith.constant 0 : i32
    return %c0_i32, %c0_i32_0 : i32, i32
  }
  func.func @transform_6(%arg0: i32) -> (i32, i32) {
    %c0_i32 = arith.constant 0 : i32
    %c0_i32_0 = arith.constant 0 : i32
    %c0_i32_1 = arith.constant 0 : i32
    return %c0_i32, %c0_i32_0 : i32, i32
  }
  func.func @transform_7(%arg0: i32) -> (i32, i32) {
    %c0_i32 = arith.constant 0 : i32
    %c0_i32_0 = arith.constant 0 : i32
    return %arg0, %c0_i32 : i32, i32
  }
}

</mosaic_0001>

<llo_original>
// kernel: tpu_custom_call.1
$region0: #{tpu_custom_call.1}
  #allocation0 [shape = 'u32[]', space=smem, size = 0x4, offset = 0x4, fixed_abs, tag = 'smem constant byte address 0x4 - core index']
  #allocation1 [shape = 'u32[144,128]{1,0:T(1,128)}', space=vmem, size = 0x12000, scoped, tag = 'internal scratch']
  %s0 = inlined_call_operand.hbm [shape: f32[16,128], index: 0, kind: input, shape index: {}]
  %s1 = inlined_call_operand.vmem [shape: f32[1,128], index: 1, kind: input, shape index: {}]
  %s2 = inlined_call_operand.hbm [shape: f32[1,128], index: 2, kind: input, shape index: {}]
  %s3 = inlined_call_operand.hbm [shape: f32[128,256], index: 3, kind: input, shape index: {}]
  %s4 = inlined_call_operand.vmem [shape: f32[1,256], index: 4, kind: input, shape index: {}]
  %s5 = inlined_call_operand.hbm [shape: f32[256,128], index: 5, kind: input, shape index: {}]
  %s6 = inlined_call_operand.vmem [shape: f32[1,128], index: 6, kind: input, shape index: {}]
  %s7 = inlined_call_operand.hbm [shape: f32[16,128], index: 7, kind: output, shape index: {}]
  %s8 = sld [smem:[#allocation0]]
  $region54: #{tpu_custom_call.1} parent=0
    _
  %s10 = ssub.s32 1, %s8
  %s11 = scalar_select 0, %s10, %s8
  $region1: #{tpu_custom_call.1} parent=0
    #allocation2 [shape = 'u8[8192]{0}', space=vmem, size = 0x2000, scoped, tag = 'input window, operand 0, single buffered']
    #allocation3 [shape = 's32[1]{0}', space=sflag, size = 0x4, scoped, tag = 'scoped memory for tpu_custom_call.1']
    #allocation4 [shape = 's32[1]{0}', space=sflag, size = 0x4, scoped, tag = 'scoped memory for tpu_custom_call.1']
    #allocation5 [shape = 'u8[512]{0}', space=vmem, size = 0x400, scoped, tag = 'input window, operand 2, single buffered']
    #allocation6 [shape = 's32[1]{0}', space=sflag, size = 0x4, scoped, tag = 'scoped memory for tpu_custom_call.1']
    #allocation7 [shape = 'u8[131072]{0}', space=vmem, size = 0x20000, scoped, tag = 'input window, operand 3, single buffered']
    #allocation8 [shape = 'u8[131072]{0}', space=vmem, size = 0x20000, scoped, tag = 'input window, operand 5, single buffered']
    #allocation9 [shape = 's32[1]{0}', space=sflag, size = 0x4, scoped, tag = 'scoped memory for tpu_custom_call.1']
    #allocation10 [shape = 'u8[8192]{0}', space=vmem, size = 0x2000, scoped, tag = 'output window, operand 0, single buffered']
    %12 = vsyncpa [#allocation3], 0
    %13 = vsyncpa [#allocation6], 0
    %14 = vsyncpa [#allocation9], 0
    %15 = vsyncpa [#allocation4], 0
    // Predicated region
    $region2: #{tpu_custom_call.1} parent=1 // pred_check
      _
    $region3: #{tpu_custom_call.1} parent=1 // pred_check_branch
      %17 = sbr.rel (0) target = $region5
    $region4: #{tpu_custom_call.1} parent=1 // pred_region
      %s19 = ssub.s32 256, 256
      %20 = vsyncadd [#allocation3], %s19
      %s21 = sshll.u32 [#allocation2], 4
      %s22 = int_to_ptr.vmem [resolvable:$true] %s21
      %27 = dma.hbm_to_vmem [thread:$0]  %s0, 256, %s22, [#allocation3], 128, 128, 8
    $region5: #{tpu_custom_call.1} parent=1 // pred_fallthru
      _
    // Predicated region
    $region6: #{tpu_custom_call.1} parent=1 // pred_check
      _
    $region7: #{tpu_custom_call.1} parent=1 // pred_check_branch
      %29 = sbr.rel (0) target = $region9
    $region8: #{tpu_custom_call.1} parent=1 // pred_region
      _
    $region9: #{tpu_custom_call.1} parent=1 // pred_fallthru
      _
    // Predicated region
    $region10: #{tpu_custom_call.1} parent=1 // pred_check
      _
    $region11: #{tpu_custom_call.1} parent=1 // pred_check_branch
      %31 = sbr.rel (0) target = $region13
    $region12: #{tpu_custom_call.1} parent=1 // pred_region
      %s33 = ssub.s32 16, 16
      %34 = vsyncadd [#allocation6], %s33
      %s36 = sshll.u32 [#allocation5], 4
      %s37 = int_to_ptr.vmem [resolvable:$true] %s36
      %39 = dma.hbm_to_vmem [thread:$0]  %s2, 16, %s37, [#allocation6]
    $region13: #{tpu_custom_call.1} parent=1 // pred_fallthru
      _
    // Predicated region
    $region14: #{tpu_custom_call.1} parent=1 // pred_check
      _
    $region15: #{tpu_custom_call.1} parent=1 // pred_check_branch
      %41 = sbr.rel (0) target = $region17
    $region16: #{tpu_custom_call.1} parent=1 // pred_region
      %s43 = ssub.s32 4096, 4096
      %44 = vsyncadd [#allocation6], %s43
      %s45 = sshll.u32 [#allocation7], 4
      %s46 = int_to_ptr.vmem [resolvable:$true] %s45
      %51 = dma.hbm_to_vmem [thread:$0]  %s3, 4096, %s46, [#allocation6], 256, 256, 16
    $region17: #{tpu_custom_call.1} parent=1 // pred_fallthru
      _
    // Predicated region
    $region18: #{tpu_custom_call.1} parent=1 // pred_check
      _
    $region19: #{tpu_custom_call.1} parent=1 // pred_check_branch
      %53 = sbr.rel (0) target = $region21
    $region20: #{tpu_custom_call.1} parent=1 // pred_region
      _
    $region21: #{tpu_custom_call.1} parent=1 // pred_fallthru
      _
    // Predicated region
    $region22: #{tpu_custom_call.1} parent=1 // pred_check
      _
    $region23: #{tpu_custom_call.1} parent=1 // pred_check_branch
      %55 = sbr.rel (0) target = $region25
    $region24: #{tpu_custom_call.1} parent=1 // pred_region
      %s57 = ssub.s32 4096, 4096
      %58 = vsyncadd [#allocation9], %s57
      %s59 = sshll.u32 [#allocation8], 4
      %s60 = int_to_ptr.vmem [resolvable:$true] %s59
      %65 = dma.hbm_to_vmem [thread:$0]  %s5, 4096, %s60, [#allocation9], 128, 128, 8
    $region25: #{tpu_custom_call.1} parent=1 // pred_fallthru
      _
    // Predicated region
    $region26: #{tpu_custom_call.1} parent=1 // pred_check
      _
    $region27: #{tpu_custom_call.1} parent=1 // pred_check_branch
      %67 = sbr.rel (0) target = $region29
    $region28: #{tpu_custom_call.1} parent=1 // pred_region
      _
    $region29: #{tpu_custom_call.1} parent=1 // pred_fallthru
      _
    // Predicated region
    $region30: #{tpu_custom_call.1} parent=1 // pred_check
      _
    $region31: #{tpu_custom_call.1} parent=1 // pred_check_branch
      %69 = sbr.rel (0) target = $region33
    $region32: #{tpu_custom_call.1} parent=1 // pred_region
      %70 = dma.done [#allocation3], 256
    $region33: #{tpu_custom_call.1} parent=1 // pred_fallthru
      _
    // Predicated region
    $region34: #{tpu_custom_call.1} parent=1 // pred_check
      _
    $region35: #{tpu_custom_call.1} parent=1 // pred_check_branch
      %72 = sbr.rel (0) target = $region37
    $region36: #{tpu_custom_call.1} parent=1 // pred_region
      %73 = dma.done [#allocation6], 16
    $region37: #{tpu_custom_call.1} parent=1 // pred_fallthru
      _
    // Predicated region
    $region38: #{tpu_custom_call.1} parent=1 // pred_check
      _
    $region39: #{tpu_custom_call.1} parent=1 // pred_check_branch
      %75 = sbr.rel (0) target = $region41
    $region40: #{tpu_custom_call.1} parent=1 // pred_region
      %76 = dma.done [#allocation6], 4096
    $region41: #{tpu_custom_call.1} parent=1 // pred_fallthru
      _
    // Predicated region
    $region42: #{tpu_custom_call.1} parent=1 // pred_check
      _
    $region43: #{tpu_custom_call.1} parent=1 // pred_check_branch
      %78 = sbr.rel (0) target = $region45
    $region44: #{tpu_custom_call.1} parent=1 // pred_region
      %79 = dma.done [#allocation9], 4096
    $region45: #{tpu_custom_call.1} parent=1 // pred_fallthru
      _
    %v80 = vld [vmem:[#allocation2] sm:$0xff]
    %v81 = vld [vmem:[#allocation2 + $0x8] sm:$0xff]
    %v82 = vld [vmem:[%s1] sm:$0x1]
    %v83 = vld [vmem:[#allocation5] sm:$0x1]
    %84 = vadd.xlane.f32.xlu0 %v80
    %v85 = vpop.xlane.xlu0 %84
    %86 = vadd.xlane.f32.xlu0 %v81
    %v87 = vpop.xlane.xlu0 %86
    %v88 = vrcp.pop 128.0
    %v89 = vmul.f32 %v85, %v88
    %v90 = vmul.f32 %v87, %v88
    %v91 = vsub.f32 %v80, %v89
    %v92 = vsub.f32 %v81, %v90
    %v93 = vmul.f32 %v91, %v91
    %v94 = vmul.f32 %v92, %v92
    %95 = vadd.xlane.f32.xlu0 %v93
    %v96 = vpop.xlane.xlu0 %95
    %97 = vadd.xlane.f32.xlu0 %v94
    %v98 = vpop.xlane.xlu0 %97
    %v99 = vmul.f32 %v96, %v88
    %v100 = vmul.f32 %v98, %v88
    %v101 = vadd.f32 %v99, 1e-05
    %v102 = vadd.f32 %v100, 1e-05
    %v103 = vrsqrt.pop %v101
    %v104 = vrsqrt.pop %v102
    %v105 = vmul.f32 %v91, %v103
    %v106 = vmul.f32 %v92, %v104
    %v108 = vlaneseq
    %v109 = vshrl.u32 %v108, 7
    %v110 = vsub.s32 0, %v109
    %v111 = vrot.slane %v82, %v110
    %v113 = vmul.f32 %v105, %v111
    %v114 = vmul.f32 %v106, %v111
    %v116 = vlaneseq
    %v117 = vshrl.u32 %v116, 7
    %v118 = vsub.s32 0, %v117
    %v119 = vrot.slane %v83, %v118
    %v121 = vadd.f32 %v113, %v119
    %v122 = vadd.f32 %v114, %v119
    %v123 = vld [vmem:[#allocation7] sm:$0xff]
    %v124 = vld [vmem:[#allocation7 + $0x8] sm:$0xff]
    %v125 = vld [vmem:[#allocation7 + $0x10] sm:$0xff]
    %v126 = vld [vmem:[#allocation7 + $0x18] sm:$0xff]
    %v127 = vld [vmem:[#allocation7 + $0x20] sm:$0xff]
    %v128 = vld [vmem:[#allocation7 + $0x28] sm:$0xff]
    %v129 = vld [vmem:[#allocation7 + $0x30] sm:$0xff]
    %v130 = vld [vmem:[#allocation7 + $0x38] sm:$0xff]
    %v131 = vld [vmem:[#allocation7 + $0x40] sm:$0xff]
    %v132 = vld [vmem:[#allocation7 + $0x48] sm:$0xff]
    %v133 = vld [vmem:[#allocation7 + $0x50] sm:$0xff]
    %v134 = vld [vmem:[#allocation7 + $0x58] sm:$0xff]
    %v135 = vld [vmem:[#allocation7 + $0x60] sm:$0xff]
    %v136 = vld [vmem:[#allocation7 + $0x68] sm:$0xff]
    %v137 = vld [vmem:[#allocation7 + $0x70] sm:$0xff]
    %v138 = vld [vmem:[#allocation7 + $0x78] sm:$0xff]
    %v139 = vld [vmem:[#allocation7 + $0x80] sm:$0xff]
    %v140 = vld [vmem:[#allocation7 + $0x88] sm:$0xff]
    %v141 = vld [vmem:[#allocation7 + $0x90] sm:$0xff]
    %v142 = vld [vmem:[#allocation7 + $0x98] sm:$0xff]
    %v143 = vld [vmem:[#allocation7 + $0xa0] sm:$0xff]
    %v144 = vld [vmem:[#allocation7 + $0xa8] sm:$0xff]
    %v145 = vld [vmem:[#allocation7 + $0xb0] sm:$0xff]
    %v146 = vld [vmem:[#allocation7 + $0xb8] sm:$0xff]
    %v147 = vld [vmem:[#allocation7 + $0xc0] sm:$0xff]
    %v148 = vld [vmem:[#allocation7 + $0xc8] sm:$0xff]
    %v149 = vld [vmem:[#allocation7 + $0xd0] sm:$0xff]
    %v150 = vld [vmem:[#allocation7 + $0xd8] sm:$0xff]
    %v151 = vld [vmem:[#allocation7 + $0xe0] sm:$0xff]
    %v152 = vld [vmem:[#allocation7 + $0xe8] sm:$0xff]
    %v153 = vld [vmem:[#allocation7 + $0xf0] sm:$0xff]
    %v154 = vld [vmem:[#allocation7 + $0xf8] sm:$0xff]
    %v155 = vld [vmem:[%s4] sm:$0x3]
    %v157 = vlaneseq
    %v158 = vshrl.u32 %v157, 7
    %v159 = vsub.s32 0, %v158
    %v160 = vrot.slane %v155, %v159
    %v161 = vlaneseq
    %v162 = vshrl.u32 %v161, 7
    %v163 = vsub.s32 1, %v162
    %v164 = vrot.slane %v155, %v163
    %167 = vmatprep.subr.mxu0 %v154
    %168 = vmatpush1.msra.mxu0 %v153
    %169 = vmatprep.subr.mxu0 %v152
    %170 = vmatpush1.msra.mxu0 %v151
    %171 = vmatprep.subr.mxu0 %v150
    %172 = vmatpush1.msra.mxu0 %v149
    %173 = vmatprep.subr.mxu0 %v148
    %174 = vmatpush1.msra.mxu0 %v147
    %175 = vmatprep.subr.mxu0 %v146
    %176 = vmatpush1.msra.mxu0 %v145
    %177 = vmatprep.subr.mxu0 %v144
    %178 = vmatpush1.msra.mxu0 %v143
    %179 = vmatprep.subr.mxu0 %v142
    %180 = vmatpush1.msra.mxu0 %v141
    %181 = vmatprep.subr.mxu0 %v140
    %182 = vmatpush1.msra.mxu0 %v139
    %183 = vmatprep.subr.mxu0 %v138
    %184 = vmatpush1.msra.mxu0 %v137
    %185 = vmatprep.subr.mxu0 %v136
    %186 = vmatpush1.msra.mxu0 %v135
    %187 = vmatprep.subr.mxu0 %v134
    %188 = vmatpush1.msra.mxu0 %v133
    %189 = vmatprep.subr.mxu0 %v132
    %190 = vmatpush1.msra.mxu0 %v131
    %191 = vmatprep.subr.mxu0 %v130
    %192 = vmatpush1.msra.mxu0 %v129
    %193 = vmatprep.subr.mxu0 %v128
    %194 = vmatpush1.msra.mxu0 %v127
    %195 = vmatprep.subr.mxu0 %v126
    %196 = vmatpush1.msra.mxu0 %v125
    %197 = vmatprep.subr.mxu0 %v124
    %198 = vmatpush1.msra.mxu0 %v123
    %199 = vmatprep.subr.mxu0 0.0
    %200 = vmatpush2.msra.mxu0 0.0
    %201 = vmatprep.subr.mxu0 0.0
    %202 = vmatpush2.msra.mxu0 0.0
    %203 = vmatprep.subr.mxu0 0.0
    %204 = vmatpush2.msra.mxu0 0.0
    %205 = vmatprep.subr.mxu0 0.0
    %206 = vmatpush2.msra.mxu0 0.0
    %207 = vmatprep.subr.mxu0 0.0
    %208 = vmatpush2.msra.mxu0 0.0
    %209 = vmatprep.subr.mxu0 0.0
    %210 = vmatpush2.msra.mxu0 0.0
    %211 = vmatprep.subr.mxu0 0.0
    %212 = vmatpush2.msra.mxu0 0.0
    %213 = vmatprep.subr.mxu0 0.0
    %214 = vmatpush2.msra.mxu0 0.0
    %215 = vmatprep.subr.mxu0 0.0
    %216 = vmatpush2.msra.mxu0 0.0
    %217 = vmatprep.subr.mxu0 0.0
    %218 = vmatpush2.msra.mxu0 0.0
    %219 = vmatprep.subr.mxu0 0.0
    %220 = vmatpush2.msra.mxu0 0.0
    %221 = vmatprep.subr.mxu0 0.0
    %222 = vmatpush2.msra.mxu0 0.0
    %223 = vmatprep.subr.mxu0 0.0
    %224 = vmatpush2.msra.mxu0 0.0
    %225 = vmatprep.subr.mxu0 0.0
    %226 = vmatpush2.msra.mxu0 0.0
    %227 = vmatprep.subr.mxu0 0.0
    %228 = vmatpush2.msra.mxu0 0.0
    %229 = vmatprep.subr.mxu0 0.0
    %230 = vmatpush2.msra.mxu0 0.0
    %231 = vmatprep.mubr.f32.mxu0 0.0
    %232 = vmatmul.mubr.f32.gmra.mxu0 %v121
    %v233 = vpop.f32.mrf.mxu0
    %v234 = vadd.f32 %v160, %v233
    %v235 = vpop.f32.mrf.mxu0
    %v236 = vadd.f32 %v164, %v235
    %237 = vmatprep.mubr.f32.mxu0 0.0
    %238 = vmatmul.mubr.f32.gmra.mxu0 %v122
    %v239 = vpop.f32.mrf.mxu0
    %v240 = vadd.f32 %v160, %v239
    %v241 = vpop.f32.mrf.mxu0
    %v242 = vadd.f32 %v164, %v241
    %243 = vdwg.mxu0
    %v244 = vmul.f32 %v234, 0.5
    %v245 = vmul.f32 %v236, 0.5
    %v246 = vmul.f32 %v240, 0.5
    %v247 = vmul.f32 %v242, 0.5
    %v248 = vmul.f32 %v234, 0.70710677
    %v249 = vmul.f32 %v236, 0.70710677
    %v250 = vmul.f32 %v240, 0.70710677
    %v251 = vmul.f32 %v242, 0.70710677
    %v252 = verf.f32.pop %v248
    %v253 = verf.f32.pop %v249
    %v254 = verf.f32.pop %v250
    %v255 = verf.f32.pop %v251
    %v256 = vadd.f32 %v252, 1.0
    %v257 = vadd.f32 %v253, 1.0
    %v258 = vadd.f32 %v254, 1.0
    %v259 = vadd.f32 %v255, 1.0
    %v260 = vmul.f32 %v244, %v256
    %v261 = vmul.f32 %v245, %v257
    %v262 = vmul.f32 %v246, %v258
    %v263 = vmul.f32 %v247, %v259
    %v264 = vld [vmem:[#allocation8] sm:$0xff]
    %v265 = vld [vmem:[#allocation8 + $0x8] sm:$0xff]
    %v266 = vld [vmem:[#allocation8 + $0x10] sm:$0xff]
    %v267 = vld [vmem:[#allocation8 + $0x18] sm:$0xff]
    %v268 = vld [vmem:[#allocation8 + $0x20] sm:$0xff]
    %v269 = vld [vmem:[#allocation8 + $0x28] sm:$0xff]
    %v270 = vld [vmem:[#allocation8 + $0x30] sm:$0xff]
    %v271 = vld [vmem:[#allocation8 + $0x38] sm:$0xff]
    %v272 = vld [vmem:[#allocation8 + $0x40] sm:$0xff]
    %v273 = vld [vmem:[#allocation8 + $0x48] sm:$0xff]
    %v274 = vld [vmem:[#allocation8 + $0x50] sm:$0xff]
    %v275 = vld [vmem:[#allocation8 + $0x58] sm:$0xff]
    %v276 = vld [vmem:[#allocation8 + $0x60] sm:$0xff]
    %v277 = vld [vmem:[#allocation8 + $0x68] sm:$0xff]
    %v278 = vld [vmem:[#allocation8 + $0x70] sm:$0xff]
    %v279 = vld [vmem:[#allocation8 + $0x78] sm:$0xff]
    %v280 = vld [vmem:[#allocation8 + $0x80] sm:$0xff]
    %v281 = vld [vmem:[#allocation8 + $0x88] sm:$0xff]
    %v282 = vld [vmem:[#allocation8 + $0x90] sm:$0xff]
    %v283 = vld [vmem:[#allocation8 + $0x98] sm:$0xff]
    %v284 = vld [vmem:[#allocation8 + $0xa0] sm:$0xff]
    %v285 = vld [vmem:[#allocation8 + $0xa8] sm:$0xff]
    %v286 = vld [vmem:[#allocation8 + $0xb0] sm:$0xff]
    %v287 = vld [vmem:[#allocation8 + $0xb8] sm:$0xff]
    %v288 = vld [vmem:[#allocation8 + $0xc0] sm:$0xff]
    %v289 = vld [vmem:[#allocation8 + $0xc8] sm:$0xff]
    %v290 = vld [vmem:[#allocation8 + $0xd0] sm:$0xff]
    %v291 = vld [vmem:[#allocation8 + $0xd8] sm:$0xff]
    %v292 = vld [vmem:[#allocation8 + $0xe0] sm:$0xff]
    %v293 = vld [vmem:[#allocation8 + $0xe8] sm:$0xff]
    %v294 = vld [vmem:[#allocation8 + $0xf0] sm:$0xff]
    %v295 = vld [vmem:[#allocation8 + $0xf8] sm:$0xff]
    %v296 = vld [vmem:[%s6] sm:$0x1]
    %v298 = vlaneseq
    %v299 = vshrl.u32 %v298, 7
    %v300 = vsub.s32 0, %v299
    %v301 = vrot.slane %v296, %v300
    %303 = vmatprep.subr.mxu0 0.0
    %304 = vmatpush1.msra.mxu0 %v279
    %305 = vmatprep.subr.mxu0 0.0
    %306 = vmatpush1.msra.mxu0 %v278
    %307 = vmatprep.subr.mxu0 0.0
    %308 = vmatpush1.msra.mxu0 %v277
    %309 = vmatprep.subr.mxu0 0.0
    %310 = vmatpush1.msra.mxu0 %v276
    %311 = vmatprep.subr.mxu0 0.0
    %312 = vmatpush1.msra.mxu0 %v275
    %313 = vmatprep.subr.mxu0 0.0
    %314 = vmatpush1.msra.mxu0 %v274
    %315 = vmatprep.subr.mxu0 0.0
    %316 = vmatpush1.msra.mxu0 %v273
    %317 = vmatprep.subr.mxu0 0.0
    %318 = vmatpush1.msra.mxu0 %v272
    %319 = vmatprep.subr.mxu0 0.0
    %320 = vmatpush1.msra.mxu0 %v271
    %321 = vmatprep.subr.mxu0 0.0
    %322 = vmatpush1.msra.mxu0 %v270
    %323 = vmatprep.subr.mxu0 0.0
    %324 = vmatpush1.msra.mxu0 %v269
    %325 = vmatprep.subr.mxu0 0.0
    %326 = vmatpush1.msra.mxu0 %v268
    %327 = vmatprep.subr.mxu0 0.0
    %328 = vmatpush1.msra.mxu0 %v267
    %329 = vmatprep.subr.mxu0 0.0
    %330 = vmatpush1.msra.mxu0 %v266
    %331 = vmatprep.subr.mxu0 0.0
    %332 = vmatpush1.msra.mxu0 %v265
    %333 = vmatprep.subr.mxu0 0.0
    %334 = vmatpush1.msra.mxu0 %v264
    %335 = vmatprep.subr.mxu0 0.0
    %336 = vmatpush2.msra.mxu0 %v295
    %337 = vmatprep.subr.mxu0 0.0
    %338 = vmatpush2.msra.mxu0 %v294
    %339 = vmatprep.subr.mxu0 0.0
    %340 = vmatpush2.msra.mxu0 %v293
    %341 = vmatprep.subr.mxu0 0.0
    %342 = vmatpush2.msra.mxu0 %v292
    %343 = vmatprep.subr.mxu0 0.0
    %344 = vmatpush2.msra.mxu0 %v291
    %345 = vmatprep.subr.mxu0 0.0
    %346 = vmatpush2.msra.mxu0 %v290
    %347 = vmatprep.subr.mxu0 0.0
    %348 = vmatpush2.msra.mxu0 %v289
    %349 = vmatprep.subr.mxu0 0.0
    %350 = vmatpush2.msra.mxu0 %v288
    %351 = vmatprep.subr.mxu0 0.0
    %352 = vmatpush2.msra.mxu0 %v287
    %353 = vmatprep.subr.mxu0 0.0
    %354 = vmatpush2.msra.mxu0 %v286
    %355 = vmatprep.subr.mxu0 0.0
    %356 = vmatpush2.msra.mxu0 %v285
    %357 = vmatprep.subr.mxu0 0.0
    %358 = vmatpush2.msra.mxu0 %v284
    %359 = vmatprep.subr.mxu0 0.0
    %360 = vmatpush2.msra.mxu0 %v283
    %361 = vmatprep.subr.mxu0 0.0
    %362 = vmatpush2.msra.mxu0 %v282
    %363 = vmatprep.subr.mxu0 0.0
    %364 = vmatpush2.msra.mxu0 %v281
    %365 = vmatprep.subr.mxu0 0.0
    %366 = vmatpush2.msra.mxu0 %v280
    %367 = vmatprep.mubr.f32.mxu0 %v261
    %368 = vmatmul.mubr.f32.gmra.mxu0 %v260
    %v369 = vpop.f32.mrf.mxu0
    %v370 = vadd.f32 %v301, %v369
    %v371 = vpop.f32.mrf.mxu0
    %372 = vmatprep.mubr.f32.mxu0 %v263
    %373 = vmatmul.mubr.f32.gmra.mxu0 %v262
    %v374 = vpop.f32.mrf.mxu0
    %v375 = vadd.f32 %v301, %v374
    %v376 = vpop.f32.mrf.mxu0
    %377 = vdwg.mxu0
    %378 = vst [vmem:[#allocation10] sm:$0xff] %v370
    %379 = vst [vmem:[#allocation10 + $0x8] sm:$0xff] %v375
    // Predicated region
    $region46: #{tpu_custom_call.1} parent=1 // pred_check
      _
    $region47: #{tpu_custom_call.1} parent=1 // pred_check_branch
      %381 = sbr.rel (0) target = $region49
    $region48: #{tpu_custom_call.1} parent=1 // pred_region
      %s383 = ssub.s32 256, 256
      %384 = vsyncadd [#allocation4], %s383
      %s385 = sshll.u32 [#allocation10], 4
      %s386 = int_to_ptr.vmem [resolvable:$true] %s385
      %391 = dma.vmem_to_hbm [thread:$0]  %s386, 256, %s7, [#allocation4], 128, 128, 8
    $region49: #{tpu_custom_call.1} parent=1 // pred_fallthru
      _
    // Predicated region
    $region50: #{tpu_custom_call.1} parent=1 // pred_check
      _
    $region51: #{tpu_custom_call.1} parent=1 // pred_check_branch
      %393 = sbr.rel (0) target = $region53
    $region52: #{tpu_custom_call.1} parent=1 // pred_region
      %394 = dma.done [#allocation4], 256
    $region53: #{tpu_custom_call.1} parent=1 // pred_fallthru
      _
    %395 = vsyncpa [#allocation3], 1
    %396 = vsyncpa [#allocation6], 1
    %397 = vsyncpa [#allocation9], 1
    %398 = vsyncpa [#allocation4], 1

</llo_original>
